<compile_context>
chip_gen: v7x
topology: tpu7x:2x2x1
jax: 0.10.0
libtpu: 0.0.40
codegen_flags: <defaults>
</compile_context>

<pallas_src>
import functools

import jax
import jax.numpy as jnp
from jax.experimental import pallas as pl
from jax.experimental.pallas import tpu as pltpu

DEFAULT_CONFIG = [[16, 16, 16], [16, 16, 16], [16, 16, 16], [16, 16, 16],
                  [16, 16, 16], [16, 16, 16], [16, 16, 16], [16, 3, 16]]

LEAKY_SLOPE = 0.1                 # nn.LeakyReLU(0.1) in the PyTorch module
ACT_DTYPE = jnp.bfloat16          # MXU-input / activation storage dtype.
                                  # jnp.float32 restores exact f32 semantics.


# ----------------------------------------------------------------------------
# tile pickers (no wrapper padding; Pallas masks the ragged edge block)
# ----------------------------------------------------------------------------
def _round_up(v, m):
    return ((v + m - 1) // m) * m


def _pick_lane_tile(L, cap=8192):
    """Lane tile (multiple of 128).  Aims for >=2 grid steps (megacore) and
    large tiles (per-step overhead amortization)."""
    if L <= 128:
        return 128
    return max(128, min(cap, _round_up((L + 1) // 2, 128)))


def _pick_row_tile(R, cap=2048):
    """Sublane tile (multiple of 16, so it is also valid for bf16 inputs)."""
    if R <= 16:
        return 16
    return max(16, min(cap, _round_up((R + 1) // 2, 16)))


# ----------------------------------------------------------------------------
# Pallas kernel 1: fused channel stack, channel-major (C, L) layout
#   h = LeakyReLU(W_in @ x + b_in)          (input_map conv + folded BN + act)
#   y = W_blk @ h + b_blk                   (all 8 blocks, collapsed at init)
# ----------------------------------------------------------------------------
def _stack_kernel(x_ref, w_in_ref, b_in_ref, w_blk_ref, b_blk_ref, o_ref):
    x = x_ref[...]                                            # (Cin, l_tile)
    h = jnp.dot(w_in_ref[...], x, preferred_element_type=jnp.float32)
    h = h + b_in_ref[...]                                     # (C0, 1) over lanes
    h = jnp.maximum(h, LEAKY_SLOPE * h)                       # LeakyReLU(0.1), f32
    y = jnp.dot(w_blk_ref[...], h.astype(w_blk_ref.dtype),
                preferred_element_type=jnp.float32)
    y = y + b_blk_ref[...]
    o_ref[...] = y.astype(o_ref.dtype)


def stack_pallas(x_cm, params):
    """x_cm: (C, L) channel-major, batch folded into lanes.  Returns (C_out, L)."""
    C, L = x_cm.shape
    w_in, b_in = params["w_in"], params["b_in"]
    w_blk, b_blk = params["w_blk"], params["b_blk"]
    c_out = w_blk.shape[0]
    l_tile = _pick_lane_tile(L)
    grid = (pl.cdiv(L, l_tile),)

    return pl.pallas_call(
        _stack_kernel,
        out_shape=jax.ShapeDtypeStruct((c_out, L), ACT_DTYPE),
        grid=grid,
        in_specs=[
            pl.BlockSpec((C, l_tile), lambda i: (0, i)),
            # tiny weights: constant index maps -> stay resident in VMEM
            pl.BlockSpec(w_in.shape, lambda i: (0, 0)),
            pl.BlockSpec(b_in.shape, lambda i: (0, 0)),
            pl.BlockSpec(w_blk.shape, lambda i: (0, 0)),
            pl.BlockSpec(b_blk.shape, lambda i: (0, 0)),
        ],
        out_specs=pl.BlockSpec((c_out, l_tile), lambda i: (0, i)),
        compiler_params=pltpu.CompilerParams(
            dimension_semantics=("parallel",)),
    )(x_cm, w_in, b_in, w_blk, b_blk)


# ----------------------------------------------------------------------------
# Pallas kernel 2: fc_out over the raw-reshaped NCHW buffer
#   rows: (R, Cin) @ (Cin, F) + b  ->  (R, F)
# ----------------------------------------------------------------------------
def _fc_kernel(x_ref, w_ref, b_ref, o_ref):
    x = x_ref[...].astype(jnp.float32)
    y = jnp.dot(x, w_ref[...], preferred_element_type=jnp.float32)
    o_ref[...] = (y + b_ref[...]).astype(o_ref.dtype)


def fc_pallas(rows, w, b):
    """rows: (R, Cin), w: (Cin, F), b: (1, F) -> (R, F) float32."""
    R, Cin = rows.shape
    F = w.shape[1]
    r_tile = _pick_row_tile(R)
    grid = (pl.cdiv(R, r_tile),)

    return pl.pallas_call(
        _fc_kernel,
        out_shape=jax.ShapeDtypeStruct((R, F), jnp.float32),
        grid=grid,
        in_specs=[
            pl.BlockSpec((r_tile, Cin), lambda i: (i, 0)),
            pl.BlockSpec(w.shape, lambda i: (0, 0)),
            pl.BlockSpec(b.shape, lambda i: (0, 0)),
        ],
        out_specs=pl.BlockSpec((r_tile, F), lambda i: (i, 0)),
        compiler_params=pltpu.CompilerParams(
            dimension_semantics=("parallel",)),
    )(rows, w, b)


# ----------------------------------------------------------------------------
# Parameter construction (deterministic, synthetic)
# ----------------------------------------------------------------------------
def init_params(key, num_channels, out_features, config, act_dtype=ACT_DTYPE):
    k_conv_w, k_conv_b, k_fc, *k_blocks = jax.random.split(key, 3 + len(config))
    in_channels = config[0][0]
    assert config[-1][1] == num_channels, (
        "fc_out raw-reshape assumes config[-1][1] == num_channels")

    # input_map: Conv2d(num_channels, in_channels, 1) — kaiming_normal fan_out
    std = (2.0 / in_channels) ** 0.5
    w_conv = std * jax.random.normal(k_conv_w, (in_channels, num_channels), jnp.float32)
    b_conv = 0.01 * jax.random.normal(k_conv_b, (in_channels,), jnp.float32)
    # Fold eval-mode BatchNorm2d (weight=1, bias=0, mean=0, var=1, eps=1e-5).
    # TODO(synk): recompute from running stats for a trained checkpoint.
    bn_scale = 1.0 / jnp.sqrt(1.0 + 1e-5)
    w_in = w_conv * bn_scale                                  # (C0, Cin)
    b_in = (b_conv * bn_scale).reshape(in_channels, 1)        # (C0, 1)

    # Blocks: linear 1x1-channel-projection stand-ins for SpatioTemporalAttention,
    # collapsed into a single affine map (W_blk, b_blk) at init time.
    # TODO(synk): replace with the real SpatioTemporalAttention when available;
    # the collapse is only valid for this linear stand-in.
    w_blk = jnp.eye(in_channels, dtype=jnp.float32)
    b_blk = jnp.zeros((in_channels, 1), jnp.float32)
    for k_b, (cin, cout, _qkv) in zip(k_blocks, config):
        std_b = 0.5 / (cin ** 0.5)          # tamed scale: keeps the 8-deep chain O(1)
        w = std_b * jax.random.normal(k_b, (cout, cin), jnp.float32)
        b = jnp.zeros((cout, 1), jnp.float32)
        w_blk = w @ w_blk
        b_blk = w @ b_blk + b

    # fc_out: Linear(num_channels, out_features) — xavier_normal, bias 0
    std_fc = (2.0 / (num_channels + out_features)) ** 0.5
    w_fc = std_fc * jax.random.normal(k_fc, (num_channels, out_features), jnp.float32)
    b_fc = jnp.zeros((1, out_features), jnp.float32)

    return {
        "w_in": w_in.astype(act_dtype), "b_in": b_in,
        "w_blk": w_blk.astype(act_dtype), "b_blk": b_blk,
        "w_fc": w_fc, "b_fc": b_fc,
    }


# ----------------------------------------------------------------------------
# STAGEncoder forward
# ----------------------------------------------------------------------------
def stag_encoder_forward(encoder_input, mask_s, mask_t, params, *,
                         num_frames, num_joints, num_channels,
                         num_persons=1, len_parts=1):
    del mask_s, mask_t  # the PyTorch forward never uses them

    # PyTorch: reshape(-1,T,V,C,M).permute(0,3,1,2,4) -> permute(0,4,1,2,3).view(NM,C,T,V)
    # We go straight to channel-major with the batch folded into the lane axis:
    # (N,T,V,C,M) -> (C, N, M, T, V) -> (C, L),  L = N*M*T*V.
    x = encoder_input.reshape(-1, num_frames, num_joints, num_channels, num_persons)
    N = x.shape[0]
    M = num_persons
    NM = N * M
    S = num_frames * num_joints          # == (T // len_parts) * (V * len_parts)
    L = NM * S
    x_cm = jnp.transpose(x, (3, 0, 4, 1, 2)).reshape(num_channels, L).astype(ACT_DTYPE)

    # Fused: input_map (1x1 conv + folded BN + LeakyReLU) + collapsed block chain.
    y_cm = stack_pallas(x_cm, params)                   # (C_out, L), lane-dense
    c_out = y_cm.shape[0]

    # Back to PyTorch's NCHW buffer, then its *raw* reshape(-1, T, V, C).
    y_nchw = jnp.transpose(y_cm.reshape(c_out, NM, S), (1, 0, 2))   # (NM, C_out, S)
    total = NM * c_out * S
    assert total % (num_frames * num_joints * num_channels) == 0, (
        "config change broke the fc_out raw reshape")
    lead = total // (num_frames * num_joints * num_channels)
    rows = y_nchw.reshape(-1, num_channels)             # (R, num_channels)

    # fc_out: Linear over the last dim.
    out = fc_pallas(rows, params["w_fc"], params["b_fc"])
    out_features = params["w_fc"].shape[1]
    return out.reshape(lead, num_frames, num_joints, out_features)


# ----------------------------------------------------------------------------
if __name__ == "__main__":
    # small, config-consistent shapes
    batch = 2
    num_frames = 8
    num_joints = 16
    num_channels = 3          # must equal DEFAULT_CONFIG[-1][1]
    num_persons = 1
    len_parts = 1
    out_features = 3

    key = jax.random.PRNGKey(0)
    k_in, k_par = jax.random.split(key)

    encoder_input = jax.random.normal(
        k_in, (batch, num_frames, num_joints, num_channels), jnp.float32)
    mask_s = jnp.ones((num_joints, num_joints), jnp.float32)   # unused by forward
    mask_t = jnp.ones((num_frames, num_frames), jnp.float32)   # unused by forward

    params = init_params(k_par, num_channels, out_features, DEFAULT_CONFIG)

    out = stag_encoder_forward(
        encoder_input, mask_s, mask_t, params,
        num_frames=num_frames, num_joints=num_joints,
        num_channels=num_channels, num_persons=num_persons, len_parts=len_parts)
    out = jax.block_until_ready(out)

    assert out.shape == (batch, num_frames, num_joints, out_features), out.shape
    assert bool(jnp.all(jnp.isfinite(out)))
    print("KERNEL_OK")
</pallas_src>

<mosaic_0001>
module attributes {stable_mosaic.version = 11 : i64} {
  func.func @_stack_kernel(%arg0: i32, %arg1: memref<3x128xbf16, #tpu.memory_space<vmem>>, %arg2: memref<16x3xbf16, #tpu.memory_space<vmem>>, %arg3: memref<16x1xf32, #tpu.memory_space<vmem>>, %arg4: memref<3x16xbf16, #tpu.memory_space<vmem>>, %arg5: memref<3x1xf32, #tpu.memory_space<vmem>>, %arg6: memref<3x128xbf16, #tpu.memory_space<vmem>>) attributes {dimension_semantics = [#tpu.dimension_semantics<parallel>], iteration_bounds = array<i64: 2>, scalar_prefetch = 0 : i64, scratch_operands = 0 : i64, tpu.core_type = #tpu.core_type<tc>, window_params = [{transform_indices = @transform_0, window_bounds = array<i64: 3, 128>}, {pipeline_mode = #tpu.pipeline_mode<synchronous>, transform_indices = @transform_1, window_bounds = array<i64: 16, 3>}, {pipeline_mode = #tpu.pipeline_mode<synchronous>, transform_indices = @transform_2, window_bounds = array<i64: 16, 1>}, {pipeline_mode = #tpu.pipeline_mode<synchronous>, transform_indices = @transform_3, window_bounds = array<i64: 3, 16>}, {pipeline_mode = #tpu.pipeline_mode<synchronous>, transform_indices = @transform_4, window_bounds = array<i64: 3, 1>}, {transform_indices = @transform_5, window_bounds = array<i64: 3, 128>}]} {
    %c0 = arith.constant 0 : index
    %c0_0 = arith.constant 0 : index
    %0 = vector.load %arg1[%c0, %c0_0] : memref<3x128xbf16, #tpu.memory_space<vmem>>, vector<3x128xbf16>
    %c0_1 = arith.constant 0 : index
    %c0_2 = arith.constant 0 : index
    %1 = vector.load %arg2[%c0_1, %c0_2] : memref<16x3xbf16, #tpu.memory_space<vmem>>, vector<16x3xbf16>
    %cst = arith.constant dense<0.000000e+00> : vector<16x128xf32>
    %2 = tpu.matmul %1, %0, %cst {dimension_numbers = #tpu.dot_dimension_numbers<[1], [0], [0], [1], [0, 0, 1, 1], [], []>} : vector<16x3xbf16>, vector<3x128xbf16>, vector<16x128xf32> -> vector<16x128xf32>
    %c0_3 = arith.constant 0 : index
    %c0_4 = arith.constant 0 : index
    %3 = vector.load %arg3[%c0_3, %c0_4] : memref<16x1xf32, #tpu.memory_space<vmem>>, vector<16x1xf32>
    %4 = vector.broadcast %3 : vector<16x1xf32> to vector<16x128xf32>
    %5 = arith.addf %2, %4 : vector<16x128xf32>
    %cst_5 = arith.constant 1.000000e-01 : f32
    %6 = vector.broadcast %cst_5 : f32 to vector<16x128xf32>
    %7 = arith.mulf %6, %5 : vector<16x128xf32>
    %8 = arith.maximumf %5, %7 : vector<16x128xf32>
    %c0_6 = arith.constant 0 : index
    %c0_7 = arith.constant 0 : index
    %9 = vector.load %arg4[%c0_6, %c0_7] : memref<3x16xbf16, #tpu.memory_space<vmem>>, vector<3x16xbf16>
    %10 = arith.truncf %8 : vector<16x128xf32> to vector<16x128xbf16>
    %cst_8 = arith.constant dense<0.000000e+00> : vector<3x128xf32>
    %11 = tpu.matmul %9, %10, %cst_8 {dimension_numbers = #tpu.dot_dimension_numbers<[1], [0], [0], [1], [0, 0, 1, 1], [], []>} : vector<3x16xbf16>, vector<16x128xbf16>, vector<3x128xf32> -> vector<3x128xf32>
    %c0_9 = arith.constant 0 : index
    %c0_10 = arith.constant 0 : index
    %12 = vector.load %arg5[%c0_9, %c0_10] : memref<3x1xf32, #tpu.memory_space<vmem>>, vector<3x1xf32>
    %13 = vector.broadcast %12 : vector<3x1xf32> to vector<3x128xf32>
    %14 = arith.addf %11, %13 : vector<3x128xf32>
    %15 = arith.truncf %14 : vector<3x128xf32> to vector<3x128xbf16>
    %c0_11 = arith.constant 0 : index
    %c0_12 = arith.constant 0 : index
    %16 = vector.load %arg6[%c0_11, %c0_12] : memref<3x128xbf16, #tpu.memory_space<vmem>>, vector<3x128xbf16>
    tpu.vector_store %arg6[%c0_11, %c0_12], %15 {strides = array<i32>} : memref<3x128xbf16, #tpu.memory_space<vmem>>, vector<3x128xbf16>,
    return
  }
  func.func @transform_0(%arg0: i32) -> (i32, i32) {
    %c0_i32 = arith.constant 0 : i32
    %c0_i32_0 = arith.constant 0 : i32
    return %c0_i32, %arg0 : i32, i32
  }
  func.func @transform_1(%arg0: i32) -> (i32, i32) {
    %c0_i32 = arith.constant 0 : i32
    %c0_i32_0 = arith.constant 0 : i32
    %c0_i32_1 = arith.constant 0 : i32
    return %c0_i32, %c0_i32_0 : i32, i32
  }
  func.func @transform_2(%arg0: i32) -> (i32, i32) {
    %c0_i32 = arith.constant 0 : i32
    %c0_i32_0 = arith.constant 0 : i32
    %c0_i32_1 = arith.constant 0 : i32
    return %c0_i32, %c0_i32_0 : i32, i32
  }
  func.func @transform_3(%arg0: i32) -> (i32, i32) {
    %c0_i32 = arith.constant 0 : i32
    %c0_i32_0 = arith.constant 0 : i32
    %c0_i32_1 = arith.constant 0 : i32
    return %c0_i32, %c0_i32_0 : i32, i32
  }
  func.func @transform_4(%arg0: i32) -> (i32, i32) {
    %c0_i32 = arith.constant 0 : i32
    %c0_i32_0 = arith.constant 0 : i32
    %c0_i32_1 = arith.constant 0 : i32
    return %c0_i32, %c0_i32_0 : i32, i32
  }
  func.func @transform_5(%arg0: i32) -> (i32, i32) {
    %c0_i32 = arith.constant 0 : i32
    %c0_i32_0 = arith.constant 0 : i32
    return %c0_i32, %arg0 : i32, i32
  }
}

</mosaic_0001>

<llo_original>
// kernel: tpu_custom_call.1
$region0: #{tpu_custom_call.1}
  #allocation0 [shape = 'u32[]', space=smem, size = 0x4, offset = 0x4, fixed_abs, tag = 'smem constant byte address 0x4 - core index']
  #allocation1 [shape = 'u32[144,128]{1,0:T(1,128)}', space=vmem, size = 0x12000, scoped, tag = 'internal scratch']
  %s0 = inlined_call_operand.vmem [shape: bf16[3,256], index: 0, kind: input, shape index: {}]
  %s1 = inlined_call_operand.vmem [shape: bf16[16,3], index: 1, kind: input, shape index: {}]
  %s2 = inlined_call_operand.vmem [shape: f32[16,1], index: 2, kind: input, shape index: {}]
  %s3 = inlined_call_operand.vmem [shape: bf16[3,16], index: 3, kind: input, shape index: {}]
  %s4 = inlined_call_operand.vmem [shape: f32[3,1], index: 4, kind: input, shape index: {}]
  %s5 = inlined_call_operand.hbm [shape: bf16[3,256], index: 5, kind: output, shape index: {}]
  %s6 = sld [smem:[#allocation0]]
  $region53: #{tpu_custom_call.1} parent=0
    _
  %s8 = ssub.s32 1, %s6
  %s9 = scalar_select 0, %s8, %s6
  $region1: #{tpu_custom_call.1} parent=0
    #allocation2 [shape = 'u8[2048]{0}', space=vmem, size = 0x800, scoped, tag = 'output window, operand 0']
    #allocation3 [shape = 's32[2]{0}', space=sflag, size = 0x8, scoped, tag = 'scoped memory for tpu_custom_call.1']
    %10 = vsyncpa [#allocation3], 0
    %s11 = scalar_lea.sflag [#allocation3], 1
    %12 = vsyncpa %s11, 0
    loop: start=0, step=1, limit=4
    $region2: #{tpu_custom_call.1} parent=1 // loop_pre_header
      _
    $region3: #{tpu_custom_call.1} parent=1 // loop_header
      %s14 = sphi 0, %s18
      %p15 = scmp.ge.s32.totalorder %s14, 4
      %s24 = sphi 0, %s26
      %s27 = sphi 0, %s24
      %s28 = sphi 0, %s27
      %s44 = sphi 0, %s28
      %s48 = sphi 0, %s48
      %s50 = sphi 0, %s48
      %s51 = sphi 0, %s50
      %s65 = sphi 0, %s51
      %s69 = sphi 0, %s69
      %s71 = sphi 0, %s69
      %s72 = sphi 0, %s71
      %s86 = sphi 0, %s72
      %s90 = sphi 0, %s90
      %s92 = sphi 0, %s90
      %s93 = sphi 0, %s92
      %s107 = sphi 0, %s93
      %s111 = sphi 0, %s111
      %s113 = sphi 0, %s111
      %s114 = sphi 0, %s113
      %s128 = sphi 0, %s114
      %s134 = sphi 0, %s136
      %s137 = sphi 0, %s134
      %s138 = sphi 0, %s137
      %s154 = sphi 0, %s138
    $region4: #{tpu_custom_call.1} parent=1 // loop_header_branch
      %17 = sbr.rel (%p15) target = $region8
    $region5: #{tpu_custom_call.1} parent=1 // loop_body
      %s19 = ssub.s32 %s14, 1
      %s20 = ssub.s32 %s14, 2
      %s21 = sadd.s32 %s14, 1
      %s22 = ssub.s32 %s14, %s21
      %p23 = scmp.eq.s32.totalorder %s22, 0
      %s25 = sadd.s32 %s24, 1
      %s26 = scalar_select %p23, %s24, %s25
      %p29 = pneg %p23
      %p30 = scmp.eq.s32.totalorder %s14, 1
      %p31 = por %p29, %p30
      %p32 = scmp.ne.s32.totalorder %s24, %s27
      %p33 = scmp.eq.s32.totalorder %s14, 0
      %p34 = por %p32, %p33
      %p35 = scmp.ne.s32.totalorder %s24, %s27
      %p36 = scmp.eq.s32.totalorder %s19, 1
      %p37 = por %p35, %p36
      %p38 = scmp.ne.s32.totalorder %s27, %s28
      %p39 = scmp.eq.s32.totalorder %s19, 0
      %p40 = por %p38, %p39
      %p41 = scmp.ne.s32.totalorder %s27, %s28
      %p42 = scmp.eq.s32.totalorder %s20, 1
      %p43 = por %p41, %p42
      %p45 = scmp.ne.s32.totalorder %s28, %s44
      %p46 = scmp.eq.s32.totalorder %s20, 0
      %p47 = por %p45, %p46
      %s49 = sadd.s32 %s48, 1
      %p52 = scmp.eq.s32.totalorder %s14, 1
      %p53 = scmp.ne.s32.totalorder %s48, %s50
      %p54 = scmp.eq.s32.totalorder %s14, 0
      %p55 = por %p53, %p54
      %p56 = scmp.ne.s32.totalorder %s48, %s50
      %p57 = scmp.eq.s32.totalorder %s19, 1
      %p58 = por %p56, %p57
      %p59 = scmp.ne.s32.totalorder %s50, %s51
      %p60 = scmp.eq.s32.totalorder %s19, 0
      %p61 = por %p59, %p60
      %p62 = scmp.ne.s32.totalorder %s50, %s51
      %p63 = scmp.eq.s32.totalorder %s20, 1
      %p64 = por %p62, %p63
      %p66 = scmp.ne.s32.totalorder %s51, %s65
      %p67 = scmp.eq.s32.totalorder %s20, 0
      %p68 = por %p66, %p67
      %s70 = sadd.s32 %s69, 1
      %p73 = scmp.eq.s32.totalorder %s14, 1
      %p74 = scmp.ne.s32.totalorder %s69, %s71
      %p75 = scmp.eq.s32.totalorder %s14, 0
      %p76 = por %p74, %p75
      %p77 = scmp.ne.s32.totalorder %s69, %s71
      %p78 = scmp.eq.s32.totalorder %s19, 1
      %p79 = por %p77, %p78
      %p80 = scmp.ne.s32.totalorder %s71, %s72
      %p81 = scmp.eq.s32.totalorder %s19, 0
      %p82 = por %p80, %p81
      %p83 = scmp.ne.s32.totalorder %s71, %s72
      %p84 = scmp.eq.s32.totalorder %s20, 1
      %p85 = por %p83, %p84
      %p87 = scmp.ne.s32.totalorder %s72, %s86
      %p88 = scmp.eq.s32.totalorder %s20, 0
      %p89 = por %p87, %p88
      %s91 = sadd.s32 %s90, 1
      %p94 = scmp.eq.s32.totalorder %s14, 1
      %p95 = scmp.ne.s32.totalorder %s90, %s92
      %p96 = scmp.eq.s32.totalorder %s14, 0
      %p97 = por %p95, %p96
      %p98 = scmp.ne.s32.totalorder %s90, %s92
      %p99 = scmp.eq.s32.totalorder %s19, 1
      %p100 = por %p98, %p99
      %p101 = scmp.ne.s32.totalorder %s92, %s93
      %p102 = scmp.eq.s32.totalorder %s19, 0
      %p103 = por %p101, %p102
      %p104 = scmp.ne.s32.totalorder %s92, %s93
      %p105 = scmp.eq.s32.totalorder %s20, 1
      %p106 = por %p104, %p105
      %p108 = scmp.ne.s32.totalorder %s93, %s107
      %p109 = scmp.eq.s32.totalorder %s20, 0
      %p110 = por %p108, %p109
      %s112 = sadd.s32 %s111, 1
      %p115 = scmp.eq.s32.totalorder %s14, 1
      %p116 = scmp.ne.s32.totalorder %s111, %s113
      %p117 = scmp.eq.s32.totalorder %s14, 0
      %p118 = por %p116, %p117
      %p119 = scmp.ne.s32.totalorder %s111, %s113
      %p120 = scmp.eq.s32.totalorder %s19, 1
      %p121 = por %p119, %p120
      %p122 = scmp.ne.s32.totalorder %s113, %s114
      %p123 = scmp.eq.s32.totalorder %s19, 0
      %p124 = por %p122, %p123
      %p125 = scmp.ne.s32.totalorder %s113, %s114
      %p126 = scmp.eq.s32.totalorder %s20, 1
      %p127 = por %p125, %p126
      %p129 = scmp.ne.s32.totalorder %s114, %s128
      %p130 = scmp.eq.s32.totalorder %s20, 0
      %p131 = por %p129, %p130
      %s132 = ssub.s32 %s14, %s21
      %p133 = scmp.eq.s32.totalorder %s132, 0
      %s135 = sadd.s32 %s134, 1
      %s136 = scalar_select %p133, %s134, %s135
      %p139 = pneg %p133
      %p140 = scmp.eq.s32.totalorder %s14, 1
      %p141 = por %p139, %p140
      %p142 = scmp.ne.s32.totalorder %s134, %s137
      %p143 = scmp.eq.s32.totalorder %s14, 0
      %p144 = por %p142, %p143
      %p145 = scmp.ne.s32.totalorder %s134, %s137
      %p146 = scmp.eq.s32.totalorder %s19, 1
      %p147 = por %p145, %p146
      %p148 = scmp.ne.s32.totalorder %s137, %s138
      %p149 = scmp.eq.s32.totalorder %s19, 0
      %p150 = por %p148, %p149
      %p151 = scmp.ne.s32.totalorder %s137, %s138
      %p152 = scmp.eq.s32.totalorder %s20, 1
      %p153 = por %p151, %p152
      %p155 = scmp.ne.s32.totalorder %s138, %s154
      %p156 = scmp.eq.s32.totalorder %s20, 0
      %p157 = por %p155, %p156
      %p158 = scmp.le.s32.totalorder 1, %s14
      %p159 = scmp.lt.s32.totalorder %s14, 3
      %p160 = pnand %p158, %p159
      %p161 = pneg %p160
      // Predicated region
      $region9: #{tpu_custom_call.1} parent=5 // pred_check
        _
      $region10: #{tpu_custom_call.1} parent=5 // pred_check_branch
        %163 = sbr.rel (%p160) target = $region12
      $region11: #{tpu_custom_call.1} parent=5 // pred_region
        %s164 = ssub.s32 %s14, 1
        // Predicated region
        $region13: #{tpu_custom_call.1} parent=11 // pred_check
          %p165 = pneg %p61
        $region14: #{tpu_custom_call.1} parent=11 // pred_check_branch
          %167 = sbr.rel (%p165) target = $region16
        $region15: #{tpu_custom_call.1} parent=11 // pred_region
          _
        $region16: #{tpu_custom_call.1} parent=11 // pred_fallthru
          _
        // Predicated region
        $region17: #{tpu_custom_call.1} parent=11 // pred_check
          %p168 = pneg %p82
        $region18: #{tpu_custom_call.1} parent=11 // pred_check_branch
          %170 = sbr.rel (%p168) target = $region20
        $region19: #{tpu_custom_call.1} parent=11 // pred_region
          _
        $region20: #{tpu_custom_call.1} parent=11 // pred_fallthru
          _
        // Predicated region
        $region21: #{tpu_custom_call.1} parent=11 // pred_check
          %p171 = pneg %p103
        $region22: #{tpu_custom_call.1} parent=11 // pred_check_branch
          %173 = sbr.rel (%p171) target = $region24
        $region23: #{tpu_custom_call.1} parent=11 // pred_region
          _
        $region24: #{tpu_custom_call.1} parent=11 // pred_fallthru
          _
        // Predicated region
        $region25: #{tpu_custom_call.1} parent=11 // pred_check
          %p174 = pneg %p124
        $region26: #{tpu_custom_call.1} parent=11 // pred_check_branch
          %176 = sbr.rel (%p174) target = $region28
        $region27: #{tpu_custom_call.1} parent=11 // pred_region
          _
        $region28: #{tpu_custom_call.1} parent=11 // pred_fallthru
          _
      $region12: #{tpu_custom_call.1} parent=5 // pred_fallthru
        _
      %p177 = scmp.lt.s32.totalorder %s14, 2
      // Predicated region
      $region29: #{tpu_custom_call.1} parent=5 // pred_check
        %p178 = pneg %p177
      $region30: #{tpu_custom_call.1} parent=5 // pred_check_branch
        %180 = sbr.rel (%p178) target = $region32
      $region31: #{tpu_custom_call.1} parent=5 // pred_region
        // Predicated region
        $region33: #{tpu_custom_call.1} parent=31 // pred_check
          %p181 = pneg %p34
        $region34: #{tpu_custom_call.1} parent=31 // pred_check_branch
          %183 = sbr.rel (%p181) target = $region36
        $region35: #{tpu_custom_call.1} parent=31 // pred_region
          %p184 = scmp.lt.s32.totalorder %s14, 1
          %s185 = scalar_select %p184, %s14, 1
          %s186 = smul.addr %s185, 2
          %s187 = scalar_lea.vmem %s0, %s186
        $region36: #{tpu_custom_call.1} parent=31 // pred_fallthru
          _
      $region32: #{tpu_custom_call.1} parent=5 // pred_fallthru
        _
      %p188 = scmp.le.s32.totalorder 1, %s14
      %p189 = scmp.lt.s32.totalorder %s14, 3
      %p190 = pnand %p188, %p189
      %p191 = pneg %p190
      // Predicated region
      $region37: #{tpu_custom_call.1} parent=5 // pred_check
        _
      $region38: #{tpu_custom_call.1} parent=5 // pred_check_branch
        %193 = sbr.rel (%p190) target = $region40
      $region39: #{tpu_custom_call.1} parent=5 // pred_region
        %s194 = ssub.s32 %s14, 1
        %p195 = scmp.lt.s32.totalorder %s19, 1
        %s196 = scalar_select %p195, %s19, 1
        %s197 = smul.addr %s196, 2
        %s198 = scalar_lea.vmem %s0, %s197
        %p199 = pneg %p40
        %p200 = pneg %p37
        %p201 = pneg %p61
        %p202 = pneg %p58
        %p203 = pneg %p82
        %p204 = pneg %p79
        %p205 = pneg %p103
        %p206 = pneg %p100
        %p207 = pneg %p124
        %p208 = pneg %p121
        %p209 = pneg %p150
        %p210 = pneg %p147
        %s211 = sand.u32 %s137, 1
        %s212 = scalar_lea.sflag [#allocation3], %s211
        %s213 = sand.u32 %s137, 1
        %s214 = smul.addr %s213, 2
        %s215 = scalar_lea.vmem [#allocation2], %s214
        %p216 = scmp.lt.s32.totalorder %s19, 1
        %s217 = scalar_select %p216, %s19, 1
        %s218 = smul.addr %s217, 2
        %s219 = scalar_lea.vmem %s0, %s218
        %v221 = vld [vmem:[%s219] sm:$0x3]
        %v222 = vld [vmem:[%s1] sm:$0xf]
        %v223 = vld [vmem:[%s1 + $0x4] sm:$0xf]
        %v224 = vld [vmem:[%s2] sm:$0xff]
        %v225 = vld [vmem:[%s2 + $0x8] sm:$0xff]
        %227 = vset.pattern.permute.xlu0 0
        %228 = vperm.xlu0 %227, %v224
        %v229 = vpop.permute.xlu0 %228
        %232 = vset.pattern.permute.xlu0 0
        %233 = vperm.xlu0 %232, %v225
        %v234 = vpop.permute.xlu0 %233
        %v238 = vunpack.c.l.b16 %v222
        %v239 = vunpack.c.l.b16 %v223
        %v240 = vpack.c.b16 %v239, %v238
        %vm241 = vcmask 23552
        %v243 = vsel %vm241, %v240, 0
        %vm245 = vcmask 1040384
        %vm246 = vcmask 1041408
        %v247 = vsel %vm245, 4294967295, 65535
        %v248 = vsel %vm246, %v247, 0
        %v250 = vand.u32 %v221, %v248
        %252 = vmatprep.subr.bf16.mxu0 0
        %253 = vmatpush1.bf16.msra.mxu0 %v250
        %254 = vmatprep.subr.bf16.mxu0 0
        %255 = vmatpush1.bf16.msra.mxu0 0
        %256 = vmatprep.subr.bf16.mxu0 0
        %257 = vmatpush1.bf16.msra.mxu0 0
        %258 = vmatprep.subr.bf16.mxu0 0
        %259 = vmatpush1.bf16.msra.mxu0 0
        %260 = vmatprep.subr.bf16.mxu0 0
        %261 = vmatpush1.bf16.msra.mxu0 0
        %262 = vmatprep.subr.bf16.mxu0 0
        %263 = vmatpush1.bf16.msra.mxu0 0
        %264 = vmatprep.subr.bf16.mxu0 0
        %265 = vmatpush1.bf16.msra.mxu0 0
        %266 = vmatprep.subr.bf16.mxu0 0
        %267 = vmatpush1.bf16.msra.mxu0 0
        %268 = vmatprep.subr.bf16.mxu0 0
        %269 = vmatpush1.bf16.msra.mxu0 0
        %270 = vmatprep.subr.bf16.mxu0 0
        %271 = vmatpush1.bf16.msra.mxu0 0
        %272 = vmatprep.subr.bf16.mxu0 0
        %273 = vmatpush1.bf16.msra.mxu0 0
        %274 = vmatprep.subr.bf16.mxu0 0
        %275 = vmatpush1.bf16.msra.mxu0 0
        %276 = vmatprep.subr.bf16.mxu0 0
        %277 = vmatpush1.bf16.msra.mxu0 0
        %278 = vmatprep.subr.bf16.mxu0 0
        %279 = vmatpush1.bf16.msra.mxu0 0
        %280 = vmatprep.subr.bf16.mxu0 0
        %281 = vmatpush1.bf16.msra.mxu0 0
        %282 = vmatprep.subr.bf16.mxu0 0
        %283 = vmatpush1.bf16.msra.mxu0 0
        %284 = vmatprep.mubr.bf16.mxu0 0
        %285 = vmatmul.mubr.bf16.gmra.mrb[0].mxu0 %v243
        %v286 = vpop.f32.mrb[0].mxu0
        %v287 = vadd.f32 %v229, %v286
        %v288 = vpop.f32.mrb[0].mxu0
        %v289 = vpop.f32.mrb[0].mxu0
        %v290 = vadd.f32 %v234, %v289
        %v291 = vpop.f32.mrb[0].mxu0
        %292 = vdwg.mxu0
        %v293 = vmul.f32 %v287, 0.1
        %v294 = vmul.f32 %v290, 0.1
        %v295 = vmax.f32 %v287, %v293
        %v296 = vmax.f32 %v290, %v294
        %v297 = vld [vmem:[%s3] sm:$0x3]
        %v298 = vpack.c.bf16 %v296, %v295
        %v299 = vld [vmem:[%s4] sm:$0x7]
        %301 = vset.pattern.permute.xlu0 0
        %302 = vperm.xlu0 %301, %v299
        %v303 = vpop.permute.xlu0 %302
        %vm305 = vcmask 130048
        %v307 = vsel %vm305, %v297, 0
        %309 = vmatprep.subr.bf16.mxu0 0
        %310 = vmatpush1.bf16.msra.mxu0 %v298
        %311 = vmatprep.subr.bf16.mxu0 0
        %312 = vmatpush1.bf16.msra.mxu0 0
        %313 = vmatprep.subr.bf16.mxu0 0
        %314 = vmatpush1.bf16.msra.mxu0 0
        %315 = vmatprep.subr.bf16.mxu0 0
        %316 = vmatpush1.bf16.msra.mxu0 0
        %317 = vmatprep.subr.bf16.mxu0 0
        %318 = vmatpush1.bf16.msra.mxu0 0
        %319 = vmatprep.subr.bf16.mxu0 0
        %320 = vmatpush1.bf16.msra.mxu0 0
        %321 = vmatprep.subr.bf16.mxu0 0
        %322 = vmatpush1.bf16.msra.mxu0 0
        %323 = vmatprep.subr.bf16.mxu0 0
        %324 = vmatpush1.bf16.msra.mxu0 0
        %325 = vmatprep.subr.bf16.mxu0 0
        %326 = vmatpush1.bf16.msra.mxu0 0
        %327 = vmatprep.subr.bf16.mxu0 0
        %328 = vmatpush1.bf16.msra.mxu0 0
        %329 = vmatprep.subr.bf16.mxu0 0
        %330 = vmatpush1.bf16.msra.mxu0 0
        %331 = vmatprep.subr.bf16.mxu0 0
        %332 = vmatpush1.bf16.msra.mxu0 0
        %333 = vmatprep.subr.bf16.mxu0 0
        %334 = vmatpush1.bf16.msra.mxu0 0
        %335 = vmatprep.subr.bf16.mxu0 0
        %336 = vmatpush1.bf16.msra.mxu0 0
        %337 = vmatprep.subr.bf16.mxu0 0
        %338 = vmatpush1.bf16.msra.mxu0 0
        %339 = vmatprep.subr.bf16.mxu0 0
        %340 = vmatpush1.bf16.msra.mxu0 0
        %341 = vmatprep.mubr.bf16.mxu0 0
        %342 = vmatmul.mubr.bf16.gmra.mrb[0].mxu0 %v307
        %v343 = vpop.f32.mrb[0].mxu0
        %v344 = vadd.f32 %v303, %v343
        %v345 = vpop.f32.mrb[0].mxu0
        %v346 = vpop.f32.mrb[0].mxu0
        %v347 = vpop.f32.mrb[0].mxu0
        %348 = vdwg.mxu0
        %v349 = vpack.c.bf16 %v344, %v344
        %vm350 = vcmask 1041408
        %vm351 = vsmask.f32 1280
        %vm352 = vmand %vm350, %vm351
        %v353 = vld [vmem:[%s215] sm:$0x3]
        %v354 = vsel %vm352, %v349, %v353
        %355 = vst [vmem:[%s215] sm:$0x3] %v354
        %s356 = sand.u32 %s137, 1
        %s357 = scalar_lea.sflag [#allocation3], %s356
        %s358 = sand.u32 %s137, 1
        %s359 = smul.addr %s358, 2
        %s360 = scalar_lea.vmem [#allocation2], %s359
        // Predicated region
        $region41: #{tpu_custom_call.1} parent=39 // pred_check
          %p361 = pneg %p147
        $region42: #{tpu_custom_call.1} parent=39 // pred_check_branch
          %363 = sbr.rel (%p361) target = $region44
        $region43: #{tpu_custom_call.1} parent=39 // pred_region
          %s365 = ssub.s32 32, 32
          %366 = vsyncadd %s357, %s365
          %s367 = smul.addr %s19, 32
          %s368 = scalar_lea.hbm %s5, %s367
          %s370 = sshll.u32 %s360, 4
          %s371 = int_to_ptr.vmem [resolvable:$true] %s370
          %373 = dma.vmem_to_hbm [thread:$0]  %s371, 32, %s368, %s357
        $region44: #{tpu_custom_call.1} parent=39 // pred_fallthru
          _
      $region40: #{tpu_custom_call.1} parent=5 // pred_fallthru
        _
      %p374 = scmp.le.s32.totalorder 2, %s14
      // Predicated region
      $region45: #{tpu_custom_call.1} parent=5 // pred_check
        %p375 = pneg %p374
      $region46: #{tpu_custom_call.1} parent=5 // pred_check_branch
        %377 = sbr.rel (%p375) target = $region48
      $region47: #{tpu_custom_call.1} parent=5 // pred_region
        %s378 = ssub.s32 %s14, 2
        // Predicated region
        $region49: #{tpu_custom_call.1} parent=47 // pred_check
          %p379 = pneg %p153
        $region50: #{tpu_custom_call.1} parent=47 // pred_check_branch
          %381 = sbr.rel (%p379) target = $region52
        $region51: #{tpu_custom_call.1} parent=47 // pred_region
          %s382 = sand.u32 %s138, 1
          %s383 = scalar_lea.sflag [#allocation3], %s382
          %s384 = sand.u32 %s138, 1
          %s385 = smul.addr %s384, 2
          %s386 = scalar_lea.vmem [#allocation2], %s385
          %387 = dma.done %s383, 32
        $region52: #{tpu_custom_call.1} parent=47 // pred_fallthru
          _
      $region48: #{tpu_custom_call.1} parent=5 // pred_fallthru
        _
    $region6: #{tpu_custom_call.1} parent=1 // loop_footer
      %s18 = sadd.s32 1, %s14
    $region7: #{tpu_custom_call.1} parent=1 // loop_footer_branch
      %13 = sbr.rel target = $region3
    $region8: #{tpu_custom_call.1} parent=1 // loop_exit
      _
    %388 = vsyncpa [#allocation3], 1
    %s389 = scalar_lea.sflag [#allocation3], 1
    %390 = vsyncpa %s389, 1

</llo_original>
